<compile_context>
chip_gen: v6e
topology: v6e:2x2x1
jax: 0.10.0
libtpu: 0.0.40
codegen_flags: <defaults>
</compile_context>

<pallas_src>
import functools
import math

import jax
import jax.numpy as jnp
from jax import lax
from jax.experimental import pallas as pl
from jax.experimental.pallas import tpu as pltpu


def _round_up(x, m):
    return ((x + m - 1) // m) * m


def _fold_block(v, part_w):
    """Fold a (tm, wd) f32 tile to an (8, part_w) partial with pure vreg adds."""
    m, w = v.shape
    acc = v[0:8, :]
    for rb in range(1, m // 8):                      # add whole 8-row vreg groups
        acc = acc + v[rb * 8:(rb + 1) * 8, :]
    out = acc[:, 0:part_w]
    for cb in range(1, w // part_w):                 # add whole 128-lane vreg columns
        out = out + acc[:, cb * part_w:(cb + 1) * part_w]
    return out


def _focal_loss_kernel(x_ref, t_ref, out_ref, *, alpha, gamma,
                       n_valid_rows, block_rows, part_w):
    i = pl.program_id(0)

    # Elementwise math in f32 regardless of input dtype (bf16 pass-through).
    x = x_ref[...].astype(jnp.float32)   # [tm, wd] logits
    t = t_ref[...].astype(jnp.float32)   # [tm, wd] targets

    # Mask ragged trailing rows (only emitted if raggedness exists).  Mask x/t
    # before exp/log so undefined tail data cannot produce Inf/NaN.
    ragged = (n_valid_rows % block_rows) != 0
    if ragged:
        row_ids = i * block_rows + lax.broadcasted_iota(jnp.int32, x.shape, 0)
        valid = row_ids < n_valid_rows
        x = jnp.where(valid, x, 0.0)
        t = jnp.where(valid, t, 0.0)

    # Shared exponential: e = exp(-|x|)  (single EUP exp per element).
    e = jnp.exp(-jnp.abs(x))
    one_pe = 1.0 + e

    # Numerically stable BCE with logits: ce = max(x,0) - x*t + log(1 + e)
    ce = jnp.maximum(x, 0.0) - x * t + jnp.log(one_pe)

    # Stable sigmoid from the same exp, reciprocal on the EUP vrcp slot.
    inv_1pe = pl.reciprocal(one_pe, approx=True)
    p = jnp.where(x >= 0, inv_1pe, e * inv_1pe)

    p_t = p * t + (1.0 - p) * (1.0 - t)
    one_minus_pt = 1.0 - p_t
    if gamma == 2.0:
        modulator = one_minus_pt * one_minus_pt      # avoid pow for default gamma
    else:
        modulator = jnp.power(one_minus_pt, jnp.float32(gamma))
    loss = ce * modulator

    if alpha >= 0:
        alpha_t = alpha * t + (1.0 - alpha) * (1.0 - t)
        loss = alpha_t * loss

    if ragged:
        loss = jnp.where(valid, loss, 0.0)

    # Per-block partial sum, pure VPU adds; scalar reduce happens outside.
    out_ref[0] = _fold_block(loss, part_w)


def focal_loss(feats, label, alpha=0.25, gamma=2.0, target_block_elems=512 * 1024):
    """sigmoid_focal_loss(feats, label, alpha, gamma, reduction='mean')."""
    assert feats.shape == label.shape
    shape = feats.shape
    total = int(math.prod(shape))

    # Lane-dense repack: view the flat buffer as (rows, wd) with wd a multiple
    # of 128 whenever possible; otherwise fall back to the original trailing dim.
    wd = None
    for cand in (2048, 1024, 512, 256, 128):
        if total % cand == 0:
            wd = cand
            break
    if wd is None:
        wd = shape[-1]
    rows = total // wd
    x2 = feats.reshape(rows, wd)
    t2 = label.reshape(rows, wd)

    # ~512K elements per input block (2 MiB f32 / 1 MiB bf16); multiple of 8 rows.
    tm = max(8, _round_up(min(max(target_block_elems // wd, 1), rows), 8))
    num_blocks = pl.cdiv(rows, tm)
    pw = 128 if wd % 128 == 0 else wd

    kernel = functools.partial(
        _focal_loss_kernel,
        alpha=float(alpha), gamma=float(gamma),
        n_valid_rows=rows, block_rows=tm, part_w=pw)

    partials = pl.pallas_call(
        kernel,
        out_shape=jax.ShapeDtypeStruct((num_blocks, 8, pw), jnp.float32),
        grid_spec=pltpu.PrefetchScalarGridSpec(
            num_scalar_prefetch=0,
            grid=(num_blocks,),
            in_specs=[
                pl.BlockSpec((tm, wd), lambda i: (i, 0)),
                pl.BlockSpec((tm, wd), lambda i: (i, 0)),
            ],
            out_specs=pl.BlockSpec((1, 8, pw), lambda i: (i, 0, 0)),
        ),
        compiler_params=pltpu.CompilerParams(
            dimension_semantics=("parallel",),           # no carried state -> megacore-friendly
            vmem_limit_bytes=32 * 1024 * 1024),
    )(x2, t2)

    # Tiny final reduction + mean in plain JAX (num_blocks * 1024 f32 values).
    return jnp.sum(partials) / jnp.float32(total)


def _reference_sigmoid_focal_loss(feats, label, alpha=0.25, gamma=2.0):
    # Pure-JAX mirror of torchvision.ops.sigmoid_focal_loss (reduction='mean').
    x = feats.astype(jnp.float32)
    t = label.astype(jnp.float32)
    p = jax.nn.sigmoid(x)
    ce = jnp.maximum(x, 0.0) - x * t + jnp.log(1.0 + jnp.exp(-jnp.abs(x)))
    p_t = p * t + (1.0 - p) * (1.0 - t)
    loss = ce * (1.0 - p_t) ** gamma
    alpha_t = alpha * t + (1.0 - alpha) * (1.0 - t)
    loss = alpha_t * loss
    return jnp.mean(loss)


if __name__ == "__main__":
    key = jax.random.PRNGKey(0)
    k1, k2 = jax.random.split(key)

    # Detection-style shapes: batch=2, 128 anchors (seq), 32 classes (hidden).
    B, A, C = 2, 128, 32
    feats = jax.random.normal(k1, (B, A, C), dtype=jnp.float32) * 2.0
    label = jax.random.bernoulli(k2, p=0.1, shape=(B, A, C)).astype(jnp.float32)

    loss = focal_loss(feats, label, alpha=0.25, gamma=2.0)
    jax.block_until_ready(loss)

    ref = _reference_sigmoid_focal_loss(feats, label, alpha=0.25, gamma=2.0)
    assert jnp.allclose(loss, ref, rtol=5e-3, atol=1e-6), (loss, ref)

    print("KERNEL_OK")
</pallas_src>

<mosaic_0001>
module attributes {stable_mosaic.version = 11 : i64} {
  func.func @_focal_loss_kernel(%arg0: i32, %arg1: memref<8x2048xf32, #tpu.memory_space<vmem>>, %arg2: memref<8x2048xf32, #tpu.memory_space<vmem>>, %arg3: memref<1x8x128xf32, #tpu.memory_space<vmem>>) attributes {dimension_semantics = [#tpu.dimension_semantics<parallel>], iteration_bounds = array<i64: 1>, scalar_prefetch = 0 : i64, scratch_operands = 0 : i64, tpu.core_type = #tpu.core_type<tc>, window_params = [{transform_indices = @transform_0, window_bounds = array<i64: 8, 2048>}, {transform_indices = @transform_1, window_bounds = array<i64: 8, 2048>}, {transform_indices = @transform_2, window_bounds = array<i64: 1, 8, 128>}]} {
    %c0 = arith.constant 0 : index
    %c0_0 = arith.constant 0 : index
    %0 = vector.load %arg1[%c0, %c0_0] : memref<8x2048xf32, #tpu.memory_space<vmem>>, vector<8x2048xf32>
    %c0_1 = arith.constant 0 : index
    %c0_2 = arith.constant 0 : index
    %1 = vector.load %arg2[%c0_1, %c0_2] : memref<8x2048xf32, #tpu.memory_space<vmem>>, vector<8x2048xf32>
    %c8_i32 = arith.constant 8 : i32
    %2 = arith.muli %arg0, %c8_i32 : i32
    %3 = tpu.iota {dimensions = array<i32: 0>} : vector<8x2048xi32>
    %4 = vector.broadcast %2 : i32 to vector<8x2048xi32>
    %5 = arith.addi %4, %3 : vector<8x2048xi32>
    %c4_i32 = arith.constant 4 : i32
    %6 = vector.broadcast %c4_i32 : i32 to vector<8x2048xi32>
    %7 = arith.cmpi slt, %5, %6 : vector<8x2048xi32>
    %cst = arith.constant 0.000000e+00 : f32
    %8 = vector.broadcast %cst : f32 to vector<8x2048xf32>
    %9 = arith.select %7, %0, %8 : vector<8x2048xi1>, vector<8x2048xf32>
    %cst_3 = arith.constant 0.000000e+00 : f32
    %10 = vector.broadcast %cst_3 : f32 to vector<8x2048xf32>
    %11 = arith.select %7, %1, %10 : vector<8x2048xi1>, vector<8x2048xf32>
    %12 = math.absf %9 : vector<8x2048xf32>
    %cst_4 = arith.constant 0.000000e+00 : f32
    %13 = vector.broadcast %cst_4 : f32 to vector<8x2048xf32>
    %14 = arith.subf %13, %12 : vector<8x2048xf32>
    %15 = math.exp %14 : vector<8x2048xf32>
    %cst_5 = arith.constant 1.000000e+00 : f32
    %16 = vector.broadcast %cst_5 : f32 to vector<8x2048xf32>
    %17 = arith.addf %16, %15 : vector<8x2048xf32>
    %cst_6 = arith.constant 0.000000e+00 : f32
    %18 = vector.broadcast %cst_6 : f32 to vector<8x2048xf32>
    %19 = arith.maximumf %9, %18 : vector<8x2048xf32>
    %20 = arith.mulf %9, %11 : vector<8x2048xf32>
    %21 = arith.subf %19, %20 : vector<8x2048xf32>
    %22 = math.log %17 : vector<8x2048xf32>
    %23 = arith.addf %21, %22 : vector<8x2048xf32>
    %24 = tpu.reciprocal %17 {approx = true} : vector<8x2048xf32> -> vector<8x2048xf32>
    %cst_7 = arith.constant 0.000000e+00 : f32
    %25 = vector.broadcast %cst_7 : f32 to vector<8x2048xf32>
    %26 = arith.cmpf oge, %9, %25 : vector<8x2048xf32>
    %27 = arith.mulf %15, %24 : vector<8x2048xf32>
    %28 = arith.select %26, %24, %27 : vector<8x2048xi1>, vector<8x2048xf32>
    %29 = arith.mulf %28, %11 : vector<8x2048xf32>
    %cst_8 = arith.constant 1.000000e+00 : f32
    %30 = vector.broadcast %cst_8 : f32 to vector<8x2048xf32>
    %31 = arith.subf %30, %28 : vector<8x2048xf32>
    %cst_9 = arith.constant 1.000000e+00 : f32
    %32 = vector.broadcast %cst_9 : f32 to vector<8x2048xf32>
    %33 = arith.subf %32, %11 : vector<8x2048xf32>
    %34 = arith.mulf %31, %33 : vector<8x2048xf32>
    %35 = arith.addf %29, %34 : vector<8x2048xf32>
    %cst_10 = arith.constant 1.000000e+00 : f32
    %36 = vector.broadcast %cst_10 : f32 to vector<8x2048xf32>
    %37 = arith.subf %36, %35 : vector<8x2048xf32>
    %38 = arith.mulf %37, %37 : vector<8x2048xf32>
    %39 = arith.mulf %23, %38 : vector<8x2048xf32>
    %cst_11 = arith.constant 2.500000e-01 : f32
    %40 = vector.broadcast %cst_11 : f32 to vector<8x2048xf32>
    %41 = arith.mulf %40, %11 : vector<8x2048xf32>
    %cst_12 = arith.constant 1.000000e+00 : f32
    %42 = vector.broadcast %cst_12 : f32 to vector<8x2048xf32>
    %43 = arith.subf %42, %11 : vector<8x2048xf32>
    %cst_13 = arith.constant 7.500000e-01 : f32
    %44 = vector.broadcast %cst_13 : f32 to vector<8x2048xf32>
    %45 = arith.mulf %44, %43 : vector<8x2048xf32>
    %46 = arith.addf %41, %45 : vector<8x2048xf32>
    %47 = arith.mulf %46, %39 : vector<8x2048xf32>
    %cst_14 = arith.constant 0.000000e+00 : f32
    %48 = vector.broadcast %cst_14 : f32 to vector<8x2048xf32>
    %49 = arith.select %7, %47, %48 : vector<8x2048xi1>, vector<8x2048xf32>
    %50 = vector.extract_strided_slice %49 {offsets = [0, 0], sizes = [8, 128], strides = [1, 1]} : vector<8x2048xf32> to vector<8x128xf32>
    %51 = vector.extract_strided_slice %49 {offsets = [0, 128], sizes = [8, 128], strides = [1, 1]} : vector<8x2048xf32> to vector<8x128xf32>
    %52 = arith.addf %50, %51 : vector<8x128xf32>
    %53 = vector.extract_strided_slice %49 {offsets = [0, 256], sizes = [8, 128], strides = [1, 1]} : vector<8x2048xf32> to vector<8x128xf32>
    %54 = arith.addf %52, %53 : vector<8x128xf32>
    %55 = vector.extract_strided_slice %49 {offsets = [0, 384], sizes = [8, 128], strides = [1, 1]} : vector<8x2048xf32> to vector<8x128xf32>
    %56 = arith.addf %54, %55 : vector<8x128xf32>
    %57 = vector.extract_strided_slice %49 {offsets = [0, 512], sizes = [8, 128], strides = [1, 1]} : vector<8x2048xf32> to vector<8x128xf32>
    %58 = arith.addf %56, %57 : vector<8x128xf32>
    %59 = vector.extract_strided_slice %49 {offsets = [0, 640], sizes = [8, 128], strides = [1, 1]} : vector<8x2048xf32> to vector<8x128xf32>
    %60 = arith.addf %58, %59 : vector<8x128xf32>
    %61 = vector.extract_strided_slice %49 {offsets = [0, 768], sizes = [8, 128], strides = [1, 1]} : vector<8x2048xf32> to vector<8x128xf32>
    %62 = arith.addf %60, %61 : vector<8x128xf32>
    %63 = vector.extract_strided_slice %49 {offsets = [0, 896], sizes = [8, 128], strides = [1, 1]} : vector<8x2048xf32> to vector<8x128xf32>
    %64 = arith.addf %62, %63 : vector<8x128xf32>
    %65 = vector.extract_strided_slice %49 {offsets = [0, 1024], sizes = [8, 128], strides = [1, 1]} : vector<8x2048xf32> to vector<8x128xf32>
    %66 = arith.addf %64, %65 : vector<8x128xf32>
    %67 = vector.extract_strided_slice %49 {offsets = [0, 1152], sizes = [8, 128], strides = [1, 1]} : vector<8x2048xf32> to vector<8x128xf32>
    %68 = arith.addf %66, %67 : vector<8x128xf32>
    %69 = vector.extract_strided_slice %49 {offsets = [0, 1280], sizes = [8, 128], strides = [1, 1]} : vector<8x2048xf32> to vector<8x128xf32>
    %70 = arith.addf %68, %69 : vector<8x128xf32>
    %71 = vector.extract_strided_slice %49 {offsets = [0, 1408], sizes = [8, 128], strides = [1, 1]} : vector<8x2048xf32> to vector<8x128xf32>
    %72 = arith.addf %70, %71 : vector<8x128xf32>
    %73 = vector.extract_strided_slice %49 {offsets = [0, 1536], sizes = [8, 128], strides = [1, 1]} : vector<8x2048xf32> to vector<8x128xf32>
    %74 = arith.addf %72, %73 : vector<8x128xf32>
    %75 = vector.extract_strided_slice %49 {offsets = [0, 1664], sizes = [8, 128], strides = [1, 1]} : vector<8x2048xf32> to vector<8x128xf32>
    %76 = arith.addf %74, %75 : vector<8x128xf32>
    %77 = vector.extract_strided_slice %49 {offsets = [0, 1792], sizes = [8, 128], strides = [1, 1]} : vector<8x2048xf32> to vector<8x128xf32>
    %78 = arith.addf %76, %77 : vector<8x128xf32>
    %79 = vector.extract_strided_slice %49 {offsets = [0, 1920], sizes = [8, 128], strides = [1, 1]} : vector<8x2048xf32> to vector<8x128xf32>
    %80 = arith.addf %78, %79 : vector<8x128xf32>
    %c0_15 = arith.constant 0 : index
    %c0_16 = arith.constant 0 : index
    %c0_17 = arith.constant 0 : index
    %81 = vector.load %arg3[%c0_15, %c0_16, %c0_17] : memref<1x8x128xf32, #tpu.memory_space<vmem>>, vector<1x8x128xf32>
    %82 = vector.shape_cast %81 : vector<1x8x128xf32> to vector<8x128xf32>
    %83 = vector.shape_cast %80 : vector<8x128xf32> to vector<1x8x128xf32>
    tpu.vector_store %arg3[%c0_15, %c0_16, %c0_17], %83 {strides = array<i32>} : memref<1x8x128xf32, #tpu.memory_space<vmem>>, vector<1x8x128xf32>,
    return
  }
  func.func @transform_0(%arg0: i32) -> (i32, i32) {
    %c0_i32 = arith.constant 0 : i32
    %c0_i32_0 = arith.constant 0 : i32
    return %arg0, %c0_i32 : i32, i32
  }
  func.func @transform_1(%arg0: i32) -> (i32, i32) {
    %c0_i32 = arith.constant 0 : i32
    %c0_i32_0 = arith.constant 0 : i32
    return %arg0, %c0_i32 : i32, i32
  }
  func.func @transform_2(%arg0: i32) -> (i32, i32, i32) {
    %c0_i32 = arith.constant 0 : i32
    %c0_i32_0 = arith.constant 0 : i32
    %c0_i32_1 = arith.constant 0 : i32
    return %arg0, %c0_i32, %c0_i32_0 : i32, i32, i32
  }
}

</mosaic_0001>

<llo_original>
// kernel: tpu_custom_call.1
$region0: #{tpu_custom_call.1}
  #allocation0 [shape = 'u32[]', space=smem, size = 0x4, offset = 0x4, fixed_abs, tag = 'smem constant byte address 0x4 - core index']
  #allocation1 [shape = 'u32[144,128]{1,0:T(1,128)}', space=vmem, size = 0x12000, scoped, tag = 'internal scratch']
  %s0 = inlined_call_operand.hbm [shape: f32[4,2048], index: 0, kind: input, shape index: {}]
  %s1 = inlined_call_operand.hbm [shape: f32[4,2048], index: 1, kind: input, shape index: {}]
  %s2 = inlined_call_operand.hbm [shape: f32[1,8,128], index: 2, kind: output, shape index: {}]
  %s3 = sld [smem:[#allocation0]]
  $region26: #{tpu_custom_call.1} parent=0
    _
  %s5 = ssub.s32 1, %s3
  %s6 = scalar_select 0, %s5, %s3
  $region1: #{tpu_custom_call.1} parent=0
    #allocation2 [shape = 'u8[65536]{0}', space=vmem, size = 0x10000, scoped, tag = 'input window, operand 0, single buffered']
    #allocation3 [shape = 's32[1]{0}', space=sflag, size = 0x4, scoped, tag = 'scoped memory for tpu_custom_call.1']
    #allocation4 [shape = 's32[1]{0}', space=sflag, size = 0x4, scoped, tag = 'scoped memory for tpu_custom_call.1']
    #allocation5 [shape = 'u8[65536]{0}', space=vmem, size = 0x10000, scoped, tag = 'input window, operand 1, single buffered']
    #allocation6 [shape = 's32[1]{0}', space=sflag, size = 0x4, scoped, tag = 'scoped memory for tpu_custom_call.1']
    #allocation7 [shape = 'u8[4096]{0}', space=vmem, size = 0x1000, scoped, tag = 'output window, operand 0, single buffered']
    %7 = vsyncpa [#allocation3], 0
    %8 = vsyncpa [#allocation6], 0
    %9 = vsyncpa [#allocation4], 0
    // Predicated region
    $region2: #{tpu_custom_call.1} parent=1 // pred_check
      _
    $region3: #{tpu_custom_call.1} parent=1 // pred_check_branch
      %11 = sbr.rel (0) target = $region5
    $region4: #{tpu_custom_call.1} parent=1 // pred_region
      %s13 = ssub.s32 2048, 1024
      %14 = vsyncadd [#allocation3], %s13
      %s15 = sshll.u32 [#allocation2], 4
      %s16 = int_to_ptr.vmem [resolvable:$true] %s15
      %21 = dma.hbm_to_vmem [thread:$0]  %s0, 1024, %s16, [#allocation3], 1024, 1024, 64
    $region5: #{tpu_custom_call.1} parent=1 // pred_fallthru
      _
    // Predicated region
    $region6: #{tpu_custom_call.1} parent=1 // pred_check
      _
    $region7: #{tpu_custom_call.1} parent=1 // pred_check_branch
      %23 = sbr.rel (0) target = $region9
    $region8: #{tpu_custom_call.1} parent=1 // pred_region
      %s25 = ssub.s32 2048, 1024
      %26 = vsyncadd [#allocation6], %s25
      %s27 = sshll.u32 [#allocation5], 4
      %s28 = int_to_ptr.vmem [resolvable:$true] %s27
      %33 = dma.hbm_to_vmem [thread:$0]  %s1, 1024, %s28, [#allocation6], 1024, 1024, 64
    $region9: #{tpu_custom_call.1} parent=1 // pred_fallthru
      _
    // Predicated region
    $region10: #{tpu_custom_call.1} parent=1 // pred_check
      _
    $region11: #{tpu_custom_call.1} parent=1 // pred_check_branch
      %35 = sbr.rel (0) target = $region13
    $region12: #{tpu_custom_call.1} parent=1 // pred_region
      %36 = dma.done [#allocation3], 2048
    $region13: #{tpu_custom_call.1} parent=1 // pred_fallthru
      _
    // Predicated region
    $region14: #{tpu_custom_call.1} parent=1 // pred_check
      _
    $region15: #{tpu_custom_call.1} parent=1 // pred_check_branch
      %38 = sbr.rel (0) target = $region17
    $region16: #{tpu_custom_call.1} parent=1 // pred_region
      %39 = dma.done [#allocation6], 2048
    $region17: #{tpu_custom_call.1} parent=1 // pred_fallthru
      _
    %v40 = vld [vmem:[#allocation2] sm:$0xff]
    %v41 = vld [vmem:[#allocation2 + $0x8] sm:$0xff]
    %v42 = vld [vmem:[#allocation2 + $0x10] sm:$0xff]
    %v43 = vld [vmem:[#allocation2 + $0x18] sm:$0xff]
    %v44 = vld [vmem:[#allocation2 + $0x20] sm:$0xff]
    %v45 = vld [vmem:[#allocation2 + $0x28] sm:$0xff]
    %v46 = vld [vmem:[#allocation2 + $0x30] sm:$0xff]
    %v47 = vld [vmem:[#allocation2 + $0x38] sm:$0xff]
    %v48 = vld [vmem:[#allocation2 + $0x40] sm:$0xff]
    %v49 = vld [vmem:[#allocation2 + $0x48] sm:$0xff]
    %v50 = vld [vmem:[#allocation2 + $0x50] sm:$0xff]
    %v51 = vld [vmem:[#allocation2 + $0x58] sm:$0xff]
    %v52 = vld [vmem:[#allocation2 + $0x60] sm:$0xff]
    %v53 = vld [vmem:[#allocation2 + $0x68] sm:$0xff]
    %v54 = vld [vmem:[#allocation2 + $0x70] sm:$0xff]
    %v55 = vld [vmem:[#allocation2 + $0x78] sm:$0xff]
    %v56 = vld [vmem:[#allocation5] sm:$0xff]
    %v57 = vld [vmem:[#allocation5 + $0x8] sm:$0xff]
    %v58 = vld [vmem:[#allocation5 + $0x10] sm:$0xff]
    %v59 = vld [vmem:[#allocation5 + $0x18] sm:$0xff]
    %v60 = vld [vmem:[#allocation5 + $0x20] sm:$0xff]
    %v61 = vld [vmem:[#allocation5 + $0x28] sm:$0xff]
    %v62 = vld [vmem:[#allocation5 + $0x30] sm:$0xff]
    %v63 = vld [vmem:[#allocation5 + $0x38] sm:$0xff]
    %v64 = vld [vmem:[#allocation5 + $0x40] sm:$0xff]
    %v65 = vld [vmem:[#allocation5 + $0x48] sm:$0xff]
    %v66 = vld [vmem:[#allocation5 + $0x50] sm:$0xff]
    %v67 = vld [vmem:[#allocation5 + $0x58] sm:$0xff]
    %v68 = vld [vmem:[#allocation5 + $0x60] sm:$0xff]
    %v69 = vld [vmem:[#allocation5 + $0x68] sm:$0xff]
    %v70 = vld [vmem:[#allocation5 + $0x70] sm:$0xff]
    %v71 = vld [vmem:[#allocation5 + $0x78] sm:$0xff]
    %s72 = smul.u32 0, 8
    %v73 = vlaneseq
    %v74 = vshrl.u32 %v73, 7
    %v75 = vstv %s72
    %v76 = vadd.s32 %v75, %v74
    %vm77 = vcmp.lt.s32.totalorder %v76, 4
    %v94 = vcombine.low %v40, %v48
    %v95 = vcombine.high %v40, %v48
    %v96 = vcombine.low %v41, %v49
    %v97 = vcombine.high %v41, %v49
    %v98 = vcombine.low %v42, %v50
    %v99 = vcombine.high %v42, %v50
    %v100 = vcombine.low %v43, %v51
    %v101 = vcombine.high %v43, %v51
    %v102 = vcombine.low %v44, %v52
    %v103 = vcombine.high %v44, %v52
    %v104 = vcombine.low %v45, %v53
    %v105 = vcombine.high %v45, %v53
    %v106 = vcombine.low %v46, %v54
    %v107 = vcombine.high %v46, %v54
    %v108 = vcombine.low %v47, %v55
    %v109 = vcombine.high %v47, %v55
    %v126 = vsel %vm77, %v94, 0.0
    %v127 = vsel %vm77, %v95, 0.0
    %v128 = vsel %vm77, %v96, 0.0
    %v129 = vsel %vm77, %v97, 0.0
    %v130 = vsel %vm77, %v98, 0.0
    %v131 = vsel %vm77, %v99, 0.0
    %v132 = vsel %vm77, %v100, 0.0
    %v133 = vsel %vm77, %v101, 0.0
    %v134 = vsel %vm77, %v102, 0.0
    %v135 = vsel %vm77, %v103, 0.0
    %v136 = vsel %vm77, %v104, 0.0
    %v137 = vsel %vm77, %v105, 0.0
    %v138 = vsel %vm77, %v106, 0.0
    %v139 = vsel %vm77, %v107, 0.0
    %v140 = vsel %vm77, %v108, 0.0
    %v141 = vsel %vm77, %v109, 0.0
    %v158 = vcombine.low %v56, %v64
    %v159 = vcombine.high %v56, %v64
    %v160 = vcombine.low %v57, %v65
    %v161 = vcombine.high %v57, %v65
    %v162 = vcombine.low %v58, %v66
    %v163 = vcombine.high %v58, %v66
    %v164 = vcombine.low %v59, %v67
    %v165 = vcombine.high %v59, %v67
    %v166 = vcombine.low %v60, %v68
    %v167 = vcombine.high %v60, %v68
    %v168 = vcombine.low %v61, %v69
    %v169 = vcombine.high %v61, %v69
    %v170 = vcombine.low %v62, %v70
    %v171 = vcombine.high %v62, %v70
    %v172 = vcombine.low %v63, %v71
    %v173 = vcombine.high %v63, %v71
    %v190 = vsel %vm77, %v158, 0.0
    %v191 = vsel %vm77, %v159, 0.0
    %v192 = vsel %vm77, %v160, 0.0
    %v193 = vsel %vm77, %v161, 0.0
    %v194 = vsel %vm77, %v162, 0.0
    %v195 = vsel %vm77, %v163, 0.0
    %v196 = vsel %vm77, %v164, 0.0
    %v197 = vsel %vm77, %v165, 0.0
    %v198 = vsel %vm77, %v166, 0.0
    %v199 = vsel %vm77, %v167, 0.0
    %v200 = vsel %vm77, %v168, 0.0
    %v201 = vsel %vm77, %v169, 0.0
    %v202 = vsel %vm77, %v170, 0.0
    %v203 = vsel %vm77, %v171, 0.0
    %v204 = vsel %vm77, %v172, 0.0
    %v205 = vsel %vm77, %v173, 0.0
    %v206 = vand.u32 2147483647, %v126
    %v207 = vand.u32 2147483647, %v127
    %v208 = vand.u32 2147483647, %v128
    %v209 = vand.u32 2147483647, %v129
    %v210 = vand.u32 2147483647, %v130
    %v211 = vand.u32 2147483647, %v131
    %v212 = vand.u32 2147483647, %v132
    %v213 = vand.u32 2147483647, %v133
    %v214 = vand.u32 2147483647, %v134
    %v215 = vand.u32 2147483647, %v135
    %v216 = vand.u32 2147483647, %v136
    %v217 = vand.u32 2147483647, %v137
    %v218 = vand.u32 2147483647, %v138
    %v219 = vand.u32 2147483647, %v139
    %v220 = vand.u32 2147483647, %v140
    %v221 = vand.u32 2147483647, %v141
    %v222 = vsub.f32 0.0, %v206
    %v223 = vsub.f32 0.0, %v207
    %v224 = vsub.f32 0.0, %v208
    %v225 = vsub.f32 0.0, %v209
    %v226 = vsub.f32 0.0, %v210
    %v227 = vsub.f32 0.0, %v211
    %v228 = vsub.f32 0.0, %v212
    %v229 = vsub.f32 0.0, %v213
    %v230 = vsub.f32 0.0, %v214
    %v231 = vsub.f32 0.0, %v215
    %v232 = vsub.f32 0.0, %v216
    %v233 = vsub.f32 0.0, %v217
    %v234 = vsub.f32 0.0, %v218
    %v235 = vsub.f32 0.0, %v219
    %v236 = vsub.f32 0.0, %v220
    %v237 = vsub.f32 0.0, %v221
    %v238 = vmul.f32 %v222, 1.442695
    %v239 = vpow.pop %v238
    %v240 = vmul.f32 %v223, 1.442695
    %v241 = vpow.pop %v240
    %v242 = vmul.f32 %v224, 1.442695
    %v243 = vpow.pop %v242
    %v244 = vmul.f32 %v225, 1.442695
    %v245 = vpow.pop %v244
    %v246 = vmul.f32 %v226, 1.442695
    %v247 = vpow.pop %v246
    %v248 = vmul.f32 %v227, 1.442695
    %v249 = vpow.pop %v248
    %v250 = vmul.f32 %v228, 1.442695
    %v251 = vpow.pop %v250
    %v252 = vmul.f32 %v229, 1.442695
    %v253 = vpow.pop %v252
    %v254 = vmul.f32 %v230, 1.442695
    %v255 = vpow.pop %v254
    %v256 = vmul.f32 %v231, 1.442695
    %v257 = vpow.pop %v256
    %v258 = vmul.f32 %v232, 1.442695
    %v259 = vpow.pop %v258
    %v260 = vmul.f32 %v233, 1.442695
    %v261 = vpow.pop %v260
    %v262 = vmul.f32 %v234, 1.442695
    %v263 = vpow.pop %v262
    %v264 = vmul.f32 %v235, 1.442695
    %v265 = vpow.pop %v264
    %v266 = vmul.f32 %v236, 1.442695
    %v267 = vpow.pop %v266
    %v268 = vmul.f32 %v237, 1.442695
    %v269 = vpow.pop %v268
    %v270 = vadd.f32 %v239, 1.0
    %v271 = vadd.f32 %v241, 1.0
    %v272 = vadd.f32 %v243, 1.0
    %v273 = vadd.f32 %v245, 1.0
    %v274 = vadd.f32 %v247, 1.0
    %v275 = vadd.f32 %v249, 1.0
    %v276 = vadd.f32 %v251, 1.0
    %v277 = vadd.f32 %v253, 1.0
    %v278 = vadd.f32 %v255, 1.0
    %v279 = vadd.f32 %v257, 1.0
    %v280 = vadd.f32 %v259, 1.0
    %v281 = vadd.f32 %v261, 1.0
    %v282 = vadd.f32 %v263, 1.0
    %v283 = vadd.f32 %v265, 1.0
    %v284 = vadd.f32 %v267, 1.0
    %v285 = vadd.f32 %v269, 1.0
    %v286 = vmax.f32 %v126, 0.0
    %v287 = vmax.f32 %v127, 0.0
    %v288 = vmax.f32 %v128, 0.0
    %v289 = vmax.f32 %v129, 0.0
    %v290 = vmax.f32 %v130, 0.0
    %v291 = vmax.f32 %v131, 0.0
    %v292 = vmax.f32 %v132, 0.0
    %v293 = vmax.f32 %v133, 0.0
    %v294 = vmax.f32 %v134, 0.0
    %v295 = vmax.f32 %v135, 0.0
    %v296 = vmax.f32 %v136, 0.0
    %v297 = vmax.f32 %v137, 0.0
    %v298 = vmax.f32 %v138, 0.0
    %v299 = vmax.f32 %v139, 0.0
    %v300 = vmax.f32 %v140, 0.0
    %v301 = vmax.f32 %v141, 0.0
    %v302 = vmul.f32 %v126, %v190
    %v303 = vmul.f32 %v127, %v191
    %v304 = vmul.f32 %v128, %v192
    %v305 = vmul.f32 %v129, %v193
    %v306 = vmul.f32 %v130, %v194
    %v307 = vmul.f32 %v131, %v195
    %v308 = vmul.f32 %v132, %v196
    %v309 = vmul.f32 %v133, %v197
    %v310 = vmul.f32 %v134, %v198
    %v311 = vmul.f32 %v135, %v199
    %v312 = vmul.f32 %v136, %v200
    %v313 = vmul.f32 %v137, %v201
    %v314 = vmul.f32 %v138, %v202
    %v315 = vmul.f32 %v139, %v203
    %v316 = vmul.f32 %v140, %v204
    %v317 = vmul.f32 %v141, %v205
    %v318 = vsub.f32 %v286, %v302
    %v319 = vsub.f32 %v287, %v303
    %v320 = vsub.f32 %v288, %v304
    %v321 = vsub.f32 %v289, %v305
    %v322 = vsub.f32 %v290, %v306
    %v323 = vsub.f32 %v291, %v307
    %v324 = vsub.f32 %v292, %v308
    %v325 = vsub.f32 %v293, %v309
    %v326 = vsub.f32 %v294, %v310
    %v327 = vsub.f32 %v295, %v311
    %v328 = vsub.f32 %v296, %v312
    %v329 = vsub.f32 %v297, %v313
    %v330 = vsub.f32 %v298, %v314
    %v331 = vsub.f32 %v299, %v315
    %v332 = vsub.f32 %v300, %v316
    %v333 = vsub.f32 %v301, %v317
    %v334 = vlog2.pop %v270
    %v335 = vmul.f32 %v334, 0.6931472
    %v336 = vlog2.pop %v271
    %v337 = vmul.f32 %v336, 0.6931472
    %v338 = vlog2.pop %v272
    %v339 = vmul.f32 %v338, 0.6931472
    %v340 = vlog2.pop %v273
    %v341 = vmul.f32 %v340, 0.6931472
    %v342 = vlog2.pop %v274
    %v343 = vmul.f32 %v342, 0.6931472
    %v344 = vlog2.pop %v275
    %v345 = vmul.f32 %v344, 0.6931472
    %v346 = vlog2.pop %v276
    %v347 = vmul.f32 %v346, 0.6931472
    %v348 = vlog2.pop %v277
    %v349 = vmul.f32 %v348, 0.6931472
    %v350 = vlog2.pop %v278
    %v351 = vmul.f32 %v350, 0.6931472
    %v352 = vlog2.pop %v279
    %v353 = vmul.f32 %v352, 0.6931472
    %v354 = vlog2.pop %v280
    %v355 = vmul.f32 %v354, 0.6931472
    %v356 = vlog2.pop %v281
    %v357 = vmul.f32 %v356, 0.6931472
    %v358 = vlog2.pop %v282
    %v359 = vmul.f32 %v358, 0.6931472
    %v360 = vlog2.pop %v283
    %v361 = vmul.f32 %v360, 0.6931472
    %v362 = vlog2.pop %v284
    %v363 = vmul.f32 %v362, 0.6931472
    %v364 = vlog2.pop %v285
    %v365 = vmul.f32 %v364, 0.6931472
    %v366 = vadd.f32 %v318, %v335
    %v367 = vadd.f32 %v319, %v337
    %v368 = vadd.f32 %v320, %v339
    %v369 = vadd.f32 %v321, %v341
    %v370 = vadd.f32 %v322, %v343
    %v371 = vadd.f32 %v323, %v345
    %v372 = vadd.f32 %v324, %v347
    %v373 = vadd.f32 %v325, %v349
    %v374 = vadd.f32 %v326, %v351
    %v375 = vadd.f32 %v327, %v353
    %v376 = vadd.f32 %v328, %v355
    %v377 = vadd.f32 %v329, %v357
    %v378 = vadd.f32 %v330, %v359
    %v379 = vadd.f32 %v331, %v361
    %v380 = vadd.f32 %v332, %v363
    %v381 = vadd.f32 %v333, %v365
    %v382 = vrcp.pop %v270
    %v383 = vrcp.pop %v271
    %v384 = vrcp.pop %v272
    %v385 = vrcp.pop %v273
    %v386 = vrcp.pop %v274
    %v387 = vrcp.pop %v275
    %v388 = vrcp.pop %v276
    %v389 = vrcp.pop %v277
    %v390 = vrcp.pop %v278
    %v391 = vrcp.pop %v279
    %v392 = vrcp.pop %v280
    %v393 = vrcp.pop %v281
    %v394 = vrcp.pop %v282
    %v395 = vrcp.pop %v283
    %v396 = vrcp.pop %v284
    %v397 = vrcp.pop %v285
    %vm398 = vcmp.ge.f32.partialorder %v126, 0.0
    %vm399 = vcmp.ge.f32.partialorder %v127, 0.0
    %vm400 = vcmp.ge.f32.partialorder %v128, 0.0
    %vm401 = vcmp.ge.f32.partialorder %v129, 0.0
    %vm402 = vcmp.ge.f32.partialorder %v130, 0.0
    %vm403 = vcmp.ge.f32.partialorder %v131, 0.0
    %vm404 = vcmp.ge.f32.partialorder %v132, 0.0
    %vm405 = vcmp.ge.f32.partialorder %v133, 0.0
    %vm406 = vcmp.ge.f32.partialorder %v134, 0.0
    %vm407 = vcmp.ge.f32.partialorder %v135, 0.0
    %vm408 = vcmp.ge.f32.partialorder %v136, 0.0
    %vm409 = vcmp.ge.f32.partialorder %v137, 0.0
    %vm410 = vcmp.ge.f32.partialorder %v138, 0.0
    %vm411 = vcmp.ge.f32.partialorder %v139, 0.0
    %vm412 = vcmp.ge.f32.partialorder %v140, 0.0
    %vm413 = vcmp.ge.f32.partialorder %v141, 0.0
    %v414 = vmul.f32 %v239, %v382
    %v415 = vmul.f32 %v241, %v383
    %v416 = vmul.f32 %v243, %v384
    %v417 = vmul.f32 %v245, %v385
    %v418 = vmul.f32 %v247, %v386
    %v419 = vmul.f32 %v249, %v387
    %v420 = vmul.f32 %v251, %v388
    %v421 = vmul.f32 %v253, %v389
    %v422 = vmul.f32 %v255, %v390
    %v423 = vmul.f32 %v257, %v391
    %v424 = vmul.f32 %v259, %v392
    %v425 = vmul.f32 %v261, %v393
    %v426 = vmul.f32 %v263, %v394
    %v427 = vmul.f32 %v265, %v395
    %v428 = vmul.f32 %v267, %v396
    %v429 = vmul.f32 %v269, %v397
    %v430 = vsel %vm398, %v382, %v414
    %v431 = vsel %vm399, %v383, %v415
    %v432 = vsel %vm400, %v384, %v416
    %v433 = vsel %vm401, %v385, %v417
    %v434 = vsel %vm402, %v386, %v418
    %v435 = vsel %vm403, %v387, %v419
    %v436 = vsel %vm404, %v388, %v420
    %v437 = vsel %vm405, %v389, %v421
    %v438 = vsel %vm406, %v390, %v422
    %v439 = vsel %vm407, %v391, %v423
    %v440 = vsel %vm408, %v392, %v424
    %v441 = vsel %vm409, %v393, %v425
    %v442 = vsel %vm410, %v394, %v426
    %v443 = vsel %vm411, %v395, %v427
    %v444 = vsel %vm412, %v396, %v428
    %v445 = vsel %vm413, %v397, %v429
    %v446 = vmul.f32 %v430, %v190
    %v447 = vmul.f32 %v431, %v191
    %v448 = vmul.f32 %v432, %v192
    %v449 = vmul.f32 %v433, %v193
    %v450 = vmul.f32 %v434, %v194
    %v451 = vmul.f32 %v435, %v195
    %v452 = vmul.f32 %v436, %v196
    %v453 = vmul.f32 %v437, %v197
    %v454 = vmul.f32 %v438, %v198
    %v455 = vmul.f32 %v439, %v199
    %v456 = vmul.f32 %v440, %v200
    %v457 = vmul.f32 %v441, %v201
    %v458 = vmul.f32 %v442, %v202
    %v459 = vmul.f32 %v443, %v203
    %v460 = vmul.f32 %v444, %v204
    %v461 = vmul.f32 %v445, %v205
    %v462 = vsub.f32 1.0, %v430
    %v463 = vsub.f32 1.0, %v431
    %v464 = vsub.f32 1.0, %v432
    %v465 = vsub.f32 1.0, %v433
    %v466 = vsub.f32 1.0, %v434
    %v467 = vsub.f32 1.0, %v435
    %v468 = vsub.f32 1.0, %v436
    %v469 = vsub.f32 1.0, %v437
    %v470 = vsub.f32 1.0, %v438
    %v471 = vsub.f32 1.0, %v439
    %v472 = vsub.f32 1.0, %v440
    %v473 = vsub.f32 1.0, %v441
    %v474 = vsub.f32 1.0, %v442
    %v475 = vsub.f32 1.0, %v443
    %v476 = vsub.f32 1.0, %v444
    %v477 = vsub.f32 1.0, %v445
    %v478 = vsub.f32 1.0, %v190
    %v479 = vsub.f32 1.0, %v191
    %v480 = vsub.f32 1.0, %v192
    %v481 = vsub.f32 1.0, %v193
    %v482 = vsub.f32 1.0, %v194
    %v483 = vsub.f32 1.0, %v195
    %v484 = vsub.f32 1.0, %v196
    %v485 = vsub.f32 1.0, %v197
    %v486 = vsub.f32 1.0, %v198
    %v487 = vsub.f32 1.0, %v199
    %v488 = vsub.f32 1.0, %v200
    %v489 = vsub.f32 1.0, %v201
    %v490 = vsub.f32 1.0, %v202
    %v491 = vsub.f32 1.0, %v203
    %v492 = vsub.f32 1.0, %v204
    %v493 = vsub.f32 1.0, %v205
    %v494 = vmul.f32 %v462, %v478
    %v495 = vmul.f32 %v463, %v479
    %v496 = vmul.f32 %v464, %v480
    %v497 = vmul.f32 %v465, %v481
    %v498 = vmul.f32 %v466, %v482
    %v499 = vmul.f32 %v467, %v483
    %v500 = vmul.f32 %v468, %v484
    %v501 = vmul.f32 %v469, %v485
    %v502 = vmul.f32 %v470, %v486
    %v503 = vmul.f32 %v471, %v487
    %v504 = vmul.f32 %v472, %v488
    %v505 = vmul.f32 %v473, %v489
    %v506 = vmul.f32 %v474, %v490
    %v507 = vmul.f32 %v475, %v491
    %v508 = vmul.f32 %v476, %v492
    %v509 = vmul.f32 %v477, %v493
    %v510 = vadd.f32 %v446, %v494
    %v511 = vadd.f32 %v447, %v495
    %v512 = vadd.f32 %v448, %v496
    %v513 = vadd.f32 %v449, %v497
    %v514 = vadd.f32 %v450, %v498
    %v515 = vadd.f32 %v451, %v499
    %v516 = vadd.f32 %v452, %v500
    %v517 = vadd.f32 %v453, %v501
    %v518 = vadd.f32 %v454, %v502
    %v519 = vadd.f32 %v455, %v503
    %v520 = vadd.f32 %v456, %v504
    %v521 = vadd.f32 %v457, %v505
    %v522 = vadd.f32 %v458, %v506
    %v523 = vadd.f32 %v459, %v507
    %v524 = vadd.f32 %v460, %v508
    %v525 = vadd.f32 %v461, %v509
    %v526 = vsub.f32 1.0, %v510
    %v527 = vsub.f32 1.0, %v511
    %v528 = vsub.f32 1.0, %v512
    %v529 = vsub.f32 1.0, %v513
    %v530 = vsub.f32 1.0, %v514
    %v531 = vsub.f32 1.0, %v515
    %v532 = vsub.f32 1.0, %v516
    %v533 = vsub.f32 1.0, %v517
    %v534 = vsub.f32 1.0, %v518
    %v535 = vsub.f32 1.0, %v519
    %v536 = vsub.f32 1.0, %v520
    %v537 = vsub.f32 1.0, %v521
    %v538 = vsub.f32 1.0, %v522
    %v539 = vsub.f32 1.0, %v523
    %v540 = vsub.f32 1.0, %v524
    %v541 = vsub.f32 1.0, %v525
    %v542 = vmul.f32 %v526, %v526
    %v543 = vmul.f32 %v527, %v527
    %v544 = vmul.f32 %v528, %v528
    %v545 = vmul.f32 %v529, %v529
    %v546 = vmul.f32 %v530, %v530
    %v547 = vmul.f32 %v531, %v531
    %v548 = vmul.f32 %v532, %v532
    %v549 = vmul.f32 %v533, %v533
    %v550 = vmul.f32 %v534, %v534
    %v551 = vmul.f32 %v535, %v535
    %v552 = vmul.f32 %v536, %v536
    %v553 = vmul.f32 %v537, %v537
    %v554 = vmul.f32 %v538, %v538
    %v555 = vmul.f32 %v539, %v539
    %v556 = vmul.f32 %v540, %v540
    %v557 = vmul.f32 %v541, %v541
    %v558 = vmul.f32 %v366, %v542
    %v559 = vmul.f32 %v367, %v543
    %v560 = vmul.f32 %v368, %v544
    %v561 = vmul.f32 %v369, %v545
    %v562 = vmul.f32 %v370, %v546
    %v563 = vmul.f32 %v371, %v547
    %v564 = vmul.f32 %v372, %v548
    %v565 = vmul.f32 %v373, %v549
    %v566 = vmul.f32 %v374, %v550
    %v567 = vmul.f32 %v375, %v551
    %v568 = vmul.f32 %v376, %v552
    %v569 = vmul.f32 %v377, %v553
    %v570 = vmul.f32 %v378, %v554
    %v571 = vmul.f32 %v379, %v555
    %v572 = vmul.f32 %v380, %v556
    %v573 = vmul.f32 %v381, %v557
    %v574 = vmul.f32 %v190, 0.25
    %v575 = vmul.f32 %v191, 0.25
    %v576 = vmul.f32 %v192, 0.25
    %v577 = vmul.f32 %v193, 0.25
    %v578 = vmul.f32 %v194, 0.25
    %v579 = vmul.f32 %v195, 0.25
    %v580 = vmul.f32 %v196, 0.25
    %v581 = vmul.f32 %v197, 0.25
    %v582 = vmul.f32 %v198, 0.25
    %v583 = vmul.f32 %v199, 0.25
    %v584 = vmul.f32 %v200, 0.25
    %v585 = vmul.f32 %v201, 0.25
    %v586 = vmul.f32 %v202, 0.25
    %v587 = vmul.f32 %v203, 0.25
    %v588 = vmul.f32 %v204, 0.25
    %v589 = vmul.f32 %v205, 0.25
    %v590 = vmul.f32 %v478, 0.75
    %v591 = vmul.f32 %v479, 0.75
    %v592 = vmul.f32 %v480, 0.75
    %v593 = vmul.f32 %v481, 0.75
    %v594 = vmul.f32 %v482, 0.75
    %v595 = vmul.f32 %v483, 0.75
    %v596 = vmul.f32 %v484, 0.75
    %v597 = vmul.f32 %v485, 0.75
    %v598 = vmul.f32 %v486, 0.75
    %v599 = vmul.f32 %v487, 0.75
    %v600 = vmul.f32 %v488, 0.75
    %v601 = vmul.f32 %v489, 0.75
    %v602 = vmul.f32 %v490, 0.75
    %v603 = vmul.f32 %v491, 0.75
    %v604 = vmul.f32 %v492, 0.75
    %v605 = vmul.f32 %v493, 0.75
    %v606 = vadd.f32 %v574, %v590
    %v607 = vadd.f32 %v575, %v591
    %v608 = vadd.f32 %v576, %v592
    %v609 = vadd.f32 %v577, %v593
    %v610 = vadd.f32 %v578, %v594
    %v611 = vadd.f32 %v579, %v595
    %v612 = vadd.f32 %v580, %v596
    %v613 = vadd.f32 %v581, %v597
    %v614 = vadd.f32 %v582, %v598
    %v615 = vadd.f32 %v583, %v599
    %v616 = vadd.f32 %v584, %v600
    %v617 = vadd.f32 %v585, %v601
    %v618 = vadd.f32 %v586, %v602
    %v619 = vadd.f32 %v587, %v603
    %v620 = vadd.f32 %v588, %v604
    %v621 = vadd.f32 %v589, %v605
    %v622 = vmul.f32 %v606, %v558
    %v623 = vmul.f32 %v607, %v559
    %v624 = vmul.f32 %v608, %v560
    %v625 = vmul.f32 %v609, %v561
    %v626 = vmul.f32 %v610, %v562
    %v627 = vmul.f32 %v611, %v563
    %v628 = vmul.f32 %v612, %v564
    %v629 = vmul.f32 %v613, %v565
    %v630 = vmul.f32 %v614, %v566
    %v631 = vmul.f32 %v615, %v567
    %v632 = vmul.f32 %v616, %v568
    %v633 = vmul.f32 %v617, %v569
    %v634 = vmul.f32 %v618, %v570
    %v635 = vmul.f32 %v619, %v571
    %v636 = vmul.f32 %v620, %v572
    %v637 = vmul.f32 %v621, %v573
    %v638 = vsel %vm77, %v622, 0.0
    %v639 = vsel %vm77, %v623, 0.0
    %v640 = vsel %vm77, %v624, 0.0
    %v641 = vsel %vm77, %v625, 0.0
    %v642 = vsel %vm77, %v626, 0.0
    %v643 = vsel %vm77, %v627, 0.0
    %v644 = vsel %vm77, %v628, 0.0
    %v645 = vsel %vm77, %v629, 0.0
    %v646 = vsel %vm77, %v630, 0.0
    %v647 = vsel %vm77, %v631, 0.0
    %v648 = vsel %vm77, %v632, 0.0
    %v649 = vsel %vm77, %v633, 0.0
    %v650 = vsel %vm77, %v634, 0.0
    %v651 = vsel %vm77, %v635, 0.0
    %v652 = vsel %vm77, %v636, 0.0
    %v653 = vsel %vm77, %v637, 0.0
    %v654 = vadd.f32 %v638, %v639
    %v655 = vadd.f32 %v654, %v640
    %v656 = vadd.f32 %v655, %v641
    %v657 = vadd.f32 %v656, %v642
    %v658 = vadd.f32 %v657, %v643
    %v659 = vadd.f32 %v658, %v644
    %v660 = vadd.f32 %v659, %v645
    %v661 = vadd.f32 %v660, %v646
    %v662 = vadd.f32 %v661, %v647
    %v663 = vadd.f32 %v662, %v648
    %v664 = vadd.f32 %v663, %v649
    %v665 = vadd.f32 %v664, %v650
    %v666 = vadd.f32 %v665, %v651
    %v667 = vadd.f32 %v666, %v652
    %v668 = vadd.f32 %v667, %v653
    %669 = vst [vmem:[#allocation7] sm:$0xff] %v668
    // Predicated region
    $region18: #{tpu_custom_call.1} parent=1 // pred_check
      _
    $region19: #{tpu_custom_call.1} parent=1 // pred_check_branch
      %671 = sbr.rel (0) target = $region21
    $region20: #{tpu_custom_call.1} parent=1 // pred_region
      %s673 = ssub.s32 128, 128
      %674 = vsyncadd [#allocation4], %s673
      %s676 = sshll.u32 [#allocation7], 4
      %s677 = int_to_ptr.vmem [resolvable:$true] %s676
      %679 = dma.vmem_to_hbm [thread:$0]  %s677, 128, %s2, [#allocation4]
    $region21: #{tpu_custom_call.1} parent=1 // pred_fallthru
      _
    // Predicated region
    $region22: #{tpu_custom_call.1} parent=1 // pred_check
      _
    $region23: #{tpu_custom_call.1} parent=1 // pred_check_branch
      %681 = sbr.rel (0) target = $region25
    $region24: #{tpu_custom_call.1} parent=1 // pred_region
      %682 = dma.done [#allocation4], 128
    $region25: #{tpu_custom_call.1} parent=1 // pred_fallthru
      _
    %683 = vsyncpa [#allocation3], 1
    %684 = vsyncpa [#allocation6], 1
    %685 = vsyncpa [#allocation4], 1

</llo_original>
